<compile_context>
chip_gen: v6e
topology: v6e:2x2x1
jax: 0.10.0
libtpu: 0.0.40
codegen_flags: <defaults>
</compile_context>

<pallas_src>
import math

import jax
import jax.numpy as jnp
from jax.experimental import pallas as pl
from jax.experimental.pallas import tpu as pltpu

D = 5   # event dim (size of m_mu / log_s_mu)
B = 8   # number of reparameterized samples (small synthetic batch)
TB = 8  # batch tile: 8 rows = one sublane group per grid step

_HALF_LOG_2PI = 0.5 * math.log(2.0 * math.pi)


def q_kernel(m_ref, ls_ref, eps_ref, sample_ref, logp_ref, scale_ref):
    # m_ref / ls_ref: (1, D)  -- parameter rows, broadcast over sublanes here.
    # eps_ref:        (TB, D) -- batch tile, batch on sublanes, D on lanes.
    m = m_ref[...]            # (1, D)   one vld
    ls = ls_ref[...]          # (1, D)   one vld
    eps = eps_ref[...]        # (TB, D)  one vld

    s = jnp.exp(ls)                                   # EUP slot

    scale_ref[...] = s                                # per-tile scale row
    sample_ref[...] = m + s * eps                     # loc + scale*eps (bcast)
    # log N(x; m, s) with x = m + s*eps  =>  ((x - m)/s) == eps exactly:
    logp_ref[...] = -0.5 * (eps * eps) - ls - _HALF_LOG_2PI


@jax.jit
def q_forward(m_mu, log_s_mu, eps):
    """m_mu: (D,), log_s_mu: (D,), eps: (B, D) -> (loc, scale, sample, logp)."""
    b, d = eps.shape
    nt = pl.cdiv(b, TB)  # grid over batch tiles

    m2 = m_mu.astype(jnp.float32).reshape(1, d)
    ls2 = log_s_mu.astype(jnp.float32).reshape(1, d)
    eps32 = eps.astype(jnp.float32)

    sample, logp, scale = pl.pallas_call(
        q_kernel,
        out_shape=(
            jax.ShapeDtypeStruct((b, d), jnp.float32),   # sample
            jax.ShapeDtypeStruct((b, d), jnp.float32),   # log_prob
            jax.ShapeDtypeStruct((nt, d), jnp.float32),  # scale (one row/tile)
        ),
        grid=(nt,),
        in_specs=[
            pl.BlockSpec((1, d), lambda i: (0, 0)),      # m_mu row
            pl.BlockSpec((1, d), lambda i: (0, 0)),      # log_s_mu row
            pl.BlockSpec((TB, d), lambda i: (i, 0)),     # eps batch tile
        ],
        out_specs=(
            pl.BlockSpec((TB, d), lambda i: (i, 0)),     # sample tile
            pl.BlockSpec((TB, d), lambda i: (i, 0)),     # logp tile
            pl.BlockSpec((1, d), lambda i: (i, 0)),      # scale row (per tile)
        ),
        compiler_params=pltpu.CompilerParams(
            dimension_semantics=("parallel",)),          # v7x: 2 TCs
    )(m2, ls2, eps32)

    loc = m_mu.astype(jnp.float32)   # identical to the parameter
    return loc, scale[0], sample, logp


def q_forward_ref(m_mu, log_s_mu, eps):
    s = jnp.exp(log_s_mu)
    x = m_mu[None, :] + s[None, :] * eps
    z = (x - m_mu[None, :]) / s[None, :]
    logp = -0.5 * z * z - log_s_mu[None, :] - _HALF_LOG_2PI
    return m_mu, s, x, logp


if __name__ == "__main__":
    key = jax.random.PRNGKey(0)
    k1, k2, k3 = jax.random.split(key, 3)

    # Deterministic "parameters" (nn.Parameter(t.zeros(5)) in the module;
    # initialized here with small random values so exp() is non-trivial).
    m_mu = jax.random.normal(k1, (D,), dtype=jnp.float32) * 0.1
    log_s_mu = jax.random.normal(k2, (D,), dtype=jnp.float32) * 0.1
    eps = jax.random.normal(k3, (B, D), dtype=jnp.float32)

    loc, scale, sample, logp = jax.block_until_ready(
        q_forward(m_mu, log_s_mu, eps))

    r_loc, r_scale, r_sample, r_logp = q_forward_ref(m_mu, log_s_mu, eps)
    assert jnp.allclose(loc, r_loc, atol=1e-5)
    assert jnp.allclose(scale, r_scale, atol=1e-5)
    assert jnp.allclose(sample, r_sample, atol=1e-5)
    assert jnp.allclose(logp, r_logp, atol=1e-4)

    print("KERNEL_OK")
</pallas_src>

<mosaic_0001>
module attributes {stable_mosaic.version = 11 : i64} {
  func.func @q_kernel(%arg0: i32, %arg1: memref<1x5xf32, #tpu.memory_space<vmem>>, %arg2: memref<1x5xf32, #tpu.memory_space<vmem>>, %arg3: memref<8x5xf32, #tpu.memory_space<vmem>>, %arg4: memref<8x5xf32, #tpu.memory_space<vmem>>, %arg5: memref<8x5xf32, #tpu.memory_space<vmem>>, %arg6: memref<1x5xf32, #tpu.memory_space<vmem>>) attributes {dimension_semantics = [#tpu.dimension_semantics<parallel>], iteration_bounds = array<i64: 1>, scalar_prefetch = 0 : i64, scratch_operands = 0 : i64, tpu.core_type = #tpu.core_type<tc>, window_params = [{pipeline_mode = #tpu.pipeline_mode<synchronous>, transform_indices = @transform_0, window_bounds = array<i64: 1, 5>}, {pipeline_mode = #tpu.pipeline_mode<synchronous>, transform_indices = @transform_1, window_bounds = array<i64: 1, 5>}, {transform_indices = @transform_2, window_bounds = array<i64: 8, 5>}, {transform_indices = @transform_3, window_bounds = array<i64: 8, 5>}, {transform_indices = @transform_4, window_bounds = array<i64: 8, 5>}, {transform_indices = @transform_5, window_bounds = array<i64: 1, 5>}]} {
    %c0 = arith.constant 0 : index
    %c0_0 = arith.constant 0 : index
    %0 = vector.load %arg1[%c0, %c0_0] : memref<1x5xf32, #tpu.memory_space<vmem>>, vector<1x5xf32>
    %c0_1 = arith.constant 0 : index
    %c0_2 = arith.constant 0 : index
    %1 = vector.load %arg2[%c0_1, %c0_2] : memref<1x5xf32, #tpu.memory_space<vmem>>, vector<1x5xf32>
    %c0_3 = arith.constant 0 : index
    %c0_4 = arith.constant 0 : index
    %2 = vector.load %arg3[%c0_3, %c0_4] : memref<8x5xf32, #tpu.memory_space<vmem>>, vector<8x5xf32>
    %3 = math.exp %1 : vector<1x5xf32>
    %c0_5 = arith.constant 0 : index
    %c0_6 = arith.constant 0 : index
    %4 = vector.load %arg6[%c0_5, %c0_6] : memref<1x5xf32, #tpu.memory_space<vmem>>, vector<1x5xf32>
    tpu.vector_store %arg6[%c0_5, %c0_6], %3 {strides = array<i32>} : memref<1x5xf32, #tpu.memory_space<vmem>>, vector<1x5xf32>,
    %5 = vector.broadcast %3 : vector<1x5xf32> to vector<8x5xf32>
    %6 = arith.mulf %5, %2 : vector<8x5xf32>
    %7 = vector.broadcast %0 : vector<1x5xf32> to vector<8x5xf32>
    %8 = arith.addf %7, %6 : vector<8x5xf32>
    %c0_7 = arith.constant 0 : index
    %c0_8 = arith.constant 0 : index
    %9 = vector.load %arg4[%c0_7, %c0_8] : memref<8x5xf32, #tpu.memory_space<vmem>>, vector<8x5xf32>
    tpu.vector_store %arg4[%c0_7, %c0_8], %8 {strides = array<i32>} : memref<8x5xf32, #tpu.memory_space<vmem>>, vector<8x5xf32>,
    %10 = arith.mulf %2, %2 : vector<8x5xf32>
    %cst = arith.constant -5.000000e-01 : f32
    %11 = vector.broadcast %cst : f32 to vector<8x5xf32>
    %12 = arith.mulf %11, %10 : vector<8x5xf32>
    %13 = vector.broadcast %1 : vector<1x5xf32> to vector<8x5xf32>
    %14 = arith.subf %12, %13 : vector<8x5xf32>
    %cst_9 = arith.constant 0.918938517 : f32
    %15 = vector.broadcast %cst_9 : f32 to vector<8x5xf32>
    %16 = arith.subf %14, %15 : vector<8x5xf32>
    %c0_10 = arith.constant 0 : index
    %c0_11 = arith.constant 0 : index
    %17 = vector.load %arg5[%c0_10, %c0_11] : memref<8x5xf32, #tpu.memory_space<vmem>>, vector<8x5xf32>
    tpu.vector_store %arg5[%c0_10, %c0_11], %16 {strides = array<i32>} : memref<8x5xf32, #tpu.memory_space<vmem>>, vector<8x5xf32>,
    return
  }
  func.func @transform_0(%arg0: i32) -> (i32, i32) {
    %c0_i32 = arith.constant 0 : i32
    %c0_i32_0 = arith.constant 0 : i32
    %c0_i32_1 = arith.constant 0 : i32
    return %c0_i32, %c0_i32_0 : i32, i32
  }
  func.func @transform_1(%arg0: i32) -> (i32, i32) {
    %c0_i32 = arith.constant 0 : i32
    %c0_i32_0 = arith.constant 0 : i32
    %c0_i32_1 = arith.constant 0 : i32
    return %c0_i32, %c0_i32_0 : i32, i32
  }
  func.func @transform_2(%arg0: i32) -> (i32, i32) {
    %c0_i32 = arith.constant 0 : i32
    %c0_i32_0 = arith.constant 0 : i32
    return %arg0, %c0_i32 : i32, i32
  }
  func.func @transform_3(%arg0: i32) -> (i32, i32) {
    %c0_i32 = arith.constant 0 : i32
    %c0_i32_0 = arith.constant 0 : i32
    return %arg0, %c0_i32 : i32, i32
  }
  func.func @transform_4(%arg0: i32) -> (i32, i32) {
    %c0_i32 = arith.constant 0 : i32
    %c0_i32_0 = arith.constant 0 : i32
    return %arg0, %c0_i32 : i32, i32
  }
  func.func @transform_5(%arg0: i32) -> (i32, i32) {
    %c0_i32 = arith.constant 0 : i32
    %c0_i32_0 = arith.constant 0 : i32
    return %arg0, %c0_i32 : i32, i32
  }
}

</mosaic_0001>

<llo_original>
// kernel: q_forward.1
$region0: #{q_forward.1}
  #allocation0 [shape = 'u32[]', space=smem, size = 0x4, offset = 0x4, fixed_abs, tag = 'smem constant byte address 0x4 - core index']
  #allocation1 [shape = 'u32[144,128]{1,0:T(1,128)}', space=vmem, size = 0x12000, scoped, tag = 'internal scratch']
  %s0 = inlined_call_operand.vmem [shape: f32[1,5], index: 0, kind: input, shape index: {}]
  %s1 = inlined_call_operand.vmem [shape: f32[1,5], index: 1, kind: input, shape index: {}]
  %s2 = inlined_call_operand.hbm [shape: f32[8,5], index: 2, kind: input, shape index: {}]
  %s3 = inlined_call_operand.hbm [shape: f32[8,5], index: 3, kind: output, shape index: {0}]
  %s4 = inlined_call_operand.hbm [shape: f32[8,5], index: 4, kind: output, shape index: {1}]
  %s5 = inlined_call_operand.hbm [shape: f32[1,5], index: 5, kind: output, shape index: {2}]
  %6 = xla_tuple %s3, %s4, %s5
  %s7 = sld [smem:[#allocation0]]
  $region42: #{q_forward.1} parent=0
    _
  %s9 = ssub.s32 1, %s7
  %s10 = scalar_select 0, %s9, %s7
  $region1: #{q_forward.1} parent=0
    #allocation2 [shape = 'u8[4096]{0}', space=vmem, size = 0x1000, scoped, tag = 'input window, operand 2, single buffered']
    #allocation3 [shape = 's32[1]{0}', space=sflag, size = 0x4, scoped, tag = 'scoped memory for q_forward.1']
    #allocation4 [shape = 's32[1]{0}', space=sflag, size = 0x4, scoped, tag = 'scoped memory for q_forward.1']
    #allocation5 [shape = 'u8[4096]{0}', space=vmem, size = 0x1000, scoped, tag = 'output window, operand 0, single buffered']
    #allocation6 [shape = 'u8[4096]{0}', space=vmem, size = 0x1000, scoped, tag = 'output window, operand 1, single buffered']
    #allocation7 [shape = 's32[1]{0}', space=sflag, size = 0x4, scoped, tag = 'scoped memory for q_forward.1']
    #allocation8 [shape = 'u8[512]{0}', space=vmem, size = 0x400, scoped, tag = 'output window, operand 2, single buffered']
    %11 = vsyncpa [#allocation3], 0
    %12 = vsyncpa [#allocation4], 0
    %13 = vsyncpa [#allocation7], 0
    // Predicated region
    $region2: #{q_forward.1} parent=1 // pred_check
      _
    $region3: #{q_forward.1} parent=1 // pred_check_branch
      %15 = sbr.rel (0) target = $region5
    $region4: #{q_forward.1} parent=1 // pred_region
      _
    $region5: #{q_forward.1} parent=1 // pred_fallthru
      _
    // Predicated region
    $region6: #{q_forward.1} parent=1 // pred_check
      _
    $region7: #{q_forward.1} parent=1 // pred_check_branch
      %17 = sbr.rel (0) target = $region9
    $region8: #{q_forward.1} parent=1 // pred_region
      _
    $region9: #{q_forward.1} parent=1 // pred_fallthru
      _
    // Predicated region
    $region10: #{q_forward.1} parent=1 // pred_check
      _
    $region11: #{q_forward.1} parent=1 // pred_check_branch
      %19 = sbr.rel (0) target = $region13
    $region12: #{q_forward.1} parent=1 // pred_region
      %s21 = ssub.s32 128, 128
      %22 = vsyncadd [#allocation3], %s21
      %s24 = sshll.u32 [#allocation2], 4
      %s25 = int_to_ptr.vmem [resolvable:$true] %s24
      %27 = dma.hbm_to_vmem [thread:$0]  %s2, 128, %s25, [#allocation3]
    $region13: #{q_forward.1} parent=1 // pred_fallthru
      _
    // Predicated region
    $region14: #{q_forward.1} parent=1 // pred_check
      _
    $region15: #{q_forward.1} parent=1 // pred_check_branch
      %29 = sbr.rel (0) target = $region17
    $region16: #{q_forward.1} parent=1 // pred_region
      %30 = dma.done [#allocation3], 128
    $region17: #{q_forward.1} parent=1 // pred_fallthru
      _
    %v31 = vld [vmem:[%s0] sm:$0x1]
    %v32 = vld [vmem:[%s1] sm:$0x1]
    %v33 = vld [vmem:[#allocation2] sm:$0xff]
    %v34 = vmul.f32 %v32, 1.442695
    %v35 = vpow.pop %v34
    %vm36 = vcmask 32768
    %37 = vst.msk [vmem:[#allocation8] sm:$0x1] %vm36, %v35
    %v39 = vlaneseq
    %v40 = vshrl.u32 %v39, 7
    %v41 = vsub.s32 0, %v40
    %v42 = vrot.slane %v35, %v41
    %v44 = vmul.f32 %v42, %v33
    %v46 = vlaneseq
    %v47 = vshrl.u32 %v46, 7
    %v48 = vsub.s32 0, %v47
    %v49 = vrot.slane %v31, %v48
    %v51 = vadd.f32 %v49, %v44
    %vm52 = vcmask 39936
    %53 = vst.msk [vmem:[#allocation5] sm:$0xff] %vm52, %v51
    %v54 = vmul.f32 %v33, %v33
    %v55 = vmul.f32 %v54, -0.5
    %v57 = vlaneseq
    %v58 = vshrl.u32 %v57, 7
    %v59 = vsub.s32 0, %v58
    %v60 = vrot.slane %v32, %v59
    %v62 = vsub.f32 %v55, %v60
    %v63 = vsub.f32 %v62, 0.9189385
    %64 = vst.msk [vmem:[#allocation6] sm:$0xff] %vm52, %v63
    // Predicated region
    $region18: #{q_forward.1} parent=1 // pred_check
      _
    $region19: #{q_forward.1} parent=1 // pred_check_branch
      %66 = sbr.rel (0) target = $region21
    $region20: #{q_forward.1} parent=1 // pred_region
      %s68 = ssub.s32 128, 128
      %69 = vsyncadd [#allocation4], %s68
      %s71 = sshll.u32 [#allocation5], 4
      %s72 = int_to_ptr.vmem [resolvable:$true] %s71
      %74 = dma.vmem_to_hbm [thread:$0]  %s72, 128, %s3, [#allocation4]
    $region21: #{q_forward.1} parent=1 // pred_fallthru
      _
    // Predicated region
    $region22: #{q_forward.1} parent=1 // pred_check
      _
    $region23: #{q_forward.1} parent=1 // pred_check_branch
      %76 = sbr.rel (0) target = $region25
    $region24: #{q_forward.1} parent=1 // pred_region
      %s78 = ssub.s32 128, 128
      %79 = vsyncadd [#allocation7], %s78
      %s81 = sshll.u32 [#allocation6], 4
      %s82 = int_to_ptr.vmem [resolvable:$true] %s81
      %84 = dma.vmem_to_hbm [thread:$0]  %s82, 128, %s4, [#allocation7]
    $region25: #{q_forward.1} parent=1 // pred_fallthru
      _
    // Predicated region
    $region26: #{q_forward.1} parent=1 // pred_check
      _
    $region27: #{q_forward.1} parent=1 // pred_check_branch
      %86 = sbr.rel (0) target = $region29
    $region28: #{q_forward.1} parent=1 // pred_region
      %s88 = ssub.s32 16, 16
      %89 = vsyncadd [#allocation7], %s88
      %s91 = sshll.u32 [#allocation8], 4
      %s92 = int_to_ptr.vmem [resolvable:$true] %s91
      %94 = dma.vmem_to_hbm [thread:$0]  %s92, 16, %s5, [#allocation7]
    $region29: #{q_forward.1} parent=1 // pred_fallthru
      _
    // Predicated region
    $region30: #{q_forward.1} parent=1 // pred_check
      _
    $region31: #{q_forward.1} parent=1 // pred_check_branch
      %96 = sbr.rel (0) target = $region33
    $region32: #{q_forward.1} parent=1 // pred_region
      %97 = dma.done [#allocation4], 128
    $region33: #{q_forward.1} parent=1 // pred_fallthru
      _
    // Predicated region
    $region34: #{q_forward.1} parent=1 // pred_check
      _
    $region35: #{q_forward.1} parent=1 // pred_check_branch
      %99 = sbr.rel (0) target = $region37
    $region36: #{q_forward.1} parent=1 // pred_region
      %100 = dma.done [#allocation7], 128
    $region37: #{q_forward.1} parent=1 // pred_fallthru
      _
    // Predicated region
    $region38: #{q_forward.1} parent=1 // pred_check
      _
    $region39: #{q_forward.1} parent=1 // pred_check_branch
      %102 = sbr.rel (0) target = $region41
    $region40: #{q_forward.1} parent=1 // pred_region
      %103 = dma.done [#allocation7], 16
    $region41: #{q_forward.1} parent=1 // pred_fallthru
      _
    %104 = vsyncpa [#allocation3], 1
    %105 = vsyncpa [#allocation4], 1
    %106 = vsyncpa [#allocation7], 1

</llo_original>
